<compile_context>
chip_gen: v6e
topology: v6e:2x2x1
jax: 0.10.0
libtpu: 0.0.40
codegen_flags: <defaults>
</compile_context>

<pallas_src>
import jax
import jax.numpy as jnp
from jax.experimental import pallas as pl
from jax.experimental.pallas import tpu as pltpu


def _round_up(x: int, m: int) -> int:
    return ((x + m - 1) // m) * m


_LANE = 128
# Conservative per-step VMEM budget: below the smallest scoped default (v5e: 16 MiB).
_VMEM_BUDGET_BYTES = 12 * 1024 * 1024


def _step_vmem_bytes(tm: int, S: int, H: int, in_bytes: int) -> int:
    """Padded VMEM footprint of one pipelined grid step.

    Accounts for (8,128) tile padding: the (tm, S) x block occupies tm x 128 lanes
    regardless of S, the (1, tm) output block occupies 8 sublanes, inputs/outputs are
    double-buffered, and the f32 h intermediate lives in VMEM as well.
    """
    s_pad = max(_round_up(S, _LANE), _LANE)
    h_pad = max(_round_up(H, _LANE), _LANE)
    x_buf = 2 * tm * s_pad * in_bytes                      # streamed x tile, double-buffered
    o_buf = 2 * 8 * _round_up(tm, _LANE) * 4               # (1, tm) out row, sublane-padded
    h_tmp = 2 * tm * h_pad * 4                             # f32 h + one elementwise temp
    resident = 2 * (s_pad * h_pad * in_bytes + 2 * 8 * h_pad * 4)   # w1, b1, w2
    return x_buf + o_buf + h_tmp + resident


def value_net_kernel(x_ref, w1_ref, b1_ref, w2_ref, b2_ref, o_ref):
    # fc1 on the MXU with f32 accumulation (inputs may be f32 or bf16).
    h = jnp.dot(x_ref[...], w1_ref[...], preferred_element_type=jnp.float32)   # (tm, H) f32
    # Bias + ReLU on the VPU, in f32.
    h = jnp.maximum(h + b1_ref[...], 0.0)
    # fc2 as a (1,H) x (tm,H)^T contraction: produces the lane-dense (1, tm) output row
    # directly (no (tm,1) column -> no masked partial stores, no relayout).  The extra MXU
    # work is ~H/(S*H) = 1/S of fc1's and the kernel is DMA/overhead bound.
    o = jax.lax.dot_general(
        w2_ref[...], h,
        dimension_numbers=(((1,), (1,)), ((), ())),
        preferred_element_type=jnp.float32)                                     # (1, tm) f32
    # b2 is a scalar in SMEM.
    o_ref[...] = (o + b2_ref[0, 0]).astype(o_ref.dtype)


def value_network_forward(x, w1, b1, w2, b2, *, block_b=2048,
                          use_bf16_matmul=False, jnp_fallback_below=256):
    """x: (B, S); w1: (S, H); b1: (H,)/(1,H); w2: (H,)/(H,1); b2: scalar-like.

    Returns (B, 1) float32, equivalent to torch ValueNetwork.forward(x)."""
    B, S = x.shape
    H = w1.shape[1]

    b1 = jnp.asarray(b1, jnp.float32).reshape(1, H)
    w2_row = jnp.asarray(w2, jnp.float32).reshape(1, H)
    b2 = jnp.asarray(b2, jnp.float32).reshape(1, 1)

    # Tiny-batch early-out: kernel dispatch + DMA setup dominates; let XLA fuse 3 ops.
    if B < jnp_fallback_below:
        h = jnp.maximum(jnp.asarray(x, jnp.float32) @ jnp.asarray(w1, jnp.float32) + b1, 0.0)
        return h @ w2_row.T + b2

    if use_bf16_matmul:
        # bf16 MXU inputs with f32 accumulation.  Valid on v5e/v6e/v7x (the MXU takes bf16
        # natively on all of them); halves x HBM traffic on the slowest-HBM generation.
        in_dtype, in_bytes, align = jnp.bfloat16, 2, 16
    else:
        in_dtype, in_bytes, align = jnp.float32, 4, 8
    x = x.astype(in_dtype)
    w1 = jnp.asarray(w1, in_dtype)

    # ---- Batch tile selection -------------------------------------------------------
    b_pad_min = _round_up(B, align)
    tm = min(_round_up(block_b, align), b_pad_min)
    # v7x megacore: if everything fits one tile but the batch is large, split into two
    # grid steps so both TensorCores get work on the only parallel axis we have.
    if tm >= b_pad_min and B >= 256:
        tm = _round_up((B + 1) // 2, align)
    # Cap tm with the *padded* VMEM footprint (double-buffered, lane-padded).
    while tm > align and _step_vmem_bytes(tm, S, H, in_bytes) > _VMEM_BUDGET_BYTES:
        tm = _round_up(tm // 2, align)
    # Lane-dense output: with >1 grid step the (1, tm) output block's minor dim must be a
    # multiple of 128.
    if tm < b_pad_min:
        tm = _round_up(tm, _LANE)

    bp = _round_up(B, tm)
    if bp != B:
        x = jnp.pad(x, ((0, bp - B), (0, 0)))
    num_tiles = bp // tm

    out = pl.pallas_call(
        value_net_kernel,
        out_shape=jax.ShapeDtypeStruct((1, bp), jnp.float32),
        grid=(num_tiles,),
        in_specs=[
            # x tile: the only streamed operand (default double buffering; raise to
            # pipeline_mode=pl.Buffered(3) only if a trace shows the DMA exposed).
            pl.BlockSpec((tm, S), lambda i: (i, 0)),
            pl.BlockSpec((S, H), lambda i: (0, 0)),               # w1: resident
            pl.BlockSpec((1, H), lambda i: (0, 0)),               # b1: resident
            pl.BlockSpec((1, H), lambda i: (0, 0)),               # w2 row: resident
            pl.BlockSpec(memory_space=pltpu.MemorySpace.SMEM),    # b2 scalar
        ],
        # Lane-dense output slab: one (1, tm) row per grid step, unmasked vector stores.
        out_specs=pl.BlockSpec((1, tm), lambda i: (0, i)),
        compiler_params=pltpu.CompilerParams(
            # Independent batch tiles -> shard across the 2 TensorCores on v7x.
            dimension_semantics=("parallel",),
        ),
    )(x, w1, b1, w2_row, b2)

    return out[0, :B].reshape(B, 1)


if __name__ == "__main__":
    key = jax.random.PRNGKey(0)
    kx, k1, k2, k3, k4 = jax.random.split(key, 5)

    batch, state_size, hidden_size = 8, 16, 128

    x = jax.random.normal(kx, (batch, state_size), jnp.float32)
    # nn.Linear-equivalent parameters, stored transposed for the kernel.
    w1 = jax.random.normal(k1, (state_size, hidden_size), jnp.float32) * 0.1
    b1 = jax.random.normal(k2, (hidden_size,), jnp.float32) * 0.1
    w2 = jax.random.normal(k3, (hidden_size,), jnp.float32) * 0.1
    b2 = jax.random.normal(k4, (1,), jnp.float32) * 0.1

    def ref_fwd(xx):
        h = jnp.maximum(xx @ w1 + b1[None, :], 0.0)
        return jnp.sum(h * w2[None, :], axis=-1, keepdims=True) + b2[None, :]

    # 1) Small batch, f32, Pallas path forced (fallback disabled): single full-dim tile.
    out = jax.block_until_ready(
        value_network_forward(x, w1, b1, w2, b2, jnp_fallback_below=0))
    assert out.shape == (batch, 1)
    assert jnp.allclose(out, ref_fwd(x), atol=2e-3, rtol=2e-3)

    # 2) Non-tile-multiple batch with a small explicit tile: multi-step grid, batch
    #    padding, lane-dense (1, 128) output blocks.
    xb = jax.random.normal(jax.random.PRNGKey(1), (300, state_size), jnp.float32)
    outb = jax.block_until_ready(
        value_network_forward(xb, w1, b1, w2, b2, block_b=128))
    assert outb.shape == (300, 1)
    assert jnp.allclose(outb, ref_fwd(xb), atol=2e-3, rtol=2e-3)

    # 3) Larger batch with the default (big) tile: exercises the two-tile megacore split.
    xc = jax.random.normal(jax.random.PRNGKey(2), (2048, state_size), jnp.float32)
    outc = jax.block_until_ready(value_network_forward(xc, w1, b1, w2, b2))
    assert outc.shape == (2048, 1)
    assert jnp.allclose(outc, ref_fwd(xc), atol=2e-3, rtol=2e-3)

    # 4) bf16 MXU inputs for fc1 (valid on all generations); f32 elementwise/accumulation.
    outbf = jax.block_until_ready(
        value_network_forward(xb, w1, b1, w2, b2, block_b=128, use_bf16_matmul=True))
    assert outbf.shape == (300, 1)
    assert jnp.allclose(outbf, ref_fwd(xb), atol=3e-2, rtol=3e-2)

    # 5) Tiny-batch default path: jnp fallback (dispatch overhead dominates there).
    outfb = jax.block_until_ready(value_network_forward(x, w1, b1, w2, b2))
    assert outfb.shape == (batch, 1)
    assert jnp.allclose(outfb, ref_fwd(x), atol=2e-3, rtol=2e-3)

    print("KERNEL_OK")
</pallas_src>

<mosaic_0001>
module attributes {stable_mosaic.version = 11 : i64} {
  func.func @value_net_kernel(%arg0: i32, %arg1: memref<8x16xf32, #tpu.memory_space<vmem>>, %arg2: memref<16x128xf32, #tpu.memory_space<vmem>>, %arg3: memref<1x128xf32, #tpu.memory_space<vmem>>, %arg4: memref<1x128xf32, #tpu.memory_space<vmem>>, %arg5: memref<1x1xf32, #tpu.memory_space<smem>>, %arg6: memref<1x8xf32, #tpu.memory_space<vmem>>) attributes {dimension_semantics = [#tpu.dimension_semantics<parallel>], iteration_bounds = array<i64: 1>, scalar_prefetch = 0 : i64, scratch_operands = 0 : i64, tpu.core_type = #tpu.core_type<tc>, window_params = [{transform_indices = @transform_0, window_bounds = array<i64: 8, 16>}, {pipeline_mode = #tpu.pipeline_mode<synchronous>, transform_indices = @transform_1, window_bounds = array<i64: 16, 128>}, {pipeline_mode = #tpu.pipeline_mode<synchronous>, transform_indices = @transform_2, window_bounds = array<i64: 1, 128>}, {pipeline_mode = #tpu.pipeline_mode<synchronous>, transform_indices = @transform_3, window_bounds = array<i64: 1, 128>}, {transform_indices = @transform_4, window_bounds = array<i64: 1, 1>}, {transform_indices = @transform_5, window_bounds = array<i64: 1, 8>}]} {
    %c0 = arith.constant 0 : index
    %c0_0 = arith.constant 0 : index
    %0 = vector.load %arg1[%c0, %c0_0] : memref<8x16xf32, #tpu.memory_space<vmem>>, vector<8x16xf32>
    %c0_1 = arith.constant 0 : index
    %c0_2 = arith.constant 0 : index
    %1 = vector.load %arg2[%c0_1, %c0_2] : memref<16x128xf32, #tpu.memory_space<vmem>>, vector<16x128xf32>
    %cst = arith.constant dense<0.000000e+00> : vector<8x128xf32>
    %2 = tpu.matmul %0, %1, %cst {dimension_numbers = #tpu.dot_dimension_numbers<[1], [0], [0], [1], [0, 0, 1, 1], [], []>} : vector<8x16xf32>, vector<16x128xf32>, vector<8x128xf32> -> vector<8x128xf32>
    %c0_3 = arith.constant 0 : index
    %c0_4 = arith.constant 0 : index
    %3 = vector.load %arg3[%c0_3, %c0_4] : memref<1x128xf32, #tpu.memory_space<vmem>>, vector<1x128xf32>
    %4 = vector.broadcast %3 : vector<1x128xf32> to vector<8x128xf32>
    %5 = arith.addf %2, %4 : vector<8x128xf32>
    %cst_5 = arith.constant 0.000000e+00 : f32
    %6 = vector.broadcast %cst_5 : f32 to vector<8x128xf32>
    %7 = arith.maximumf %5, %6 : vector<8x128xf32>
    %c0_6 = arith.constant 0 : index
    %c0_7 = arith.constant 0 : index
    %8 = vector.load %arg4[%c0_6, %c0_7] : memref<1x128xf32, #tpu.memory_space<vmem>>, vector<1x128xf32>
    %cst_8 = arith.constant dense<0.000000e+00> : vector<1x8xf32>
    %9 = tpu.matmul %8, %7, %cst_8 {dimension_numbers = #tpu.dot_dimension_numbers<[1], [1], [0], [0], [0, 0, 1, 0], [], []>} : vector<1x128xf32>, vector<8x128xf32>, vector<1x8xf32> -> vector<1x8xf32>
    %c0_9 = arith.constant 0 : index
    %c0_10 = arith.constant 0 : index
    %10 = memref.load %arg5[%c0_9, %c0_10] : memref<1x1xf32, #tpu.memory_space<smem>>
    %11 = vector.broadcast %10 : f32 to vector<1x8xf32>
    %12 = arith.addf %9, %11 : vector<1x8xf32>
    %c0_11 = arith.constant 0 : index
    %c0_12 = arith.constant 0 : index
    %13 = vector.load %arg6[%c0_11, %c0_12] : memref<1x8xf32, #tpu.memory_space<vmem>>, vector<1x8xf32>
    tpu.vector_store %arg6[%c0_11, %c0_12], %12 {strides = array<i32>} : memref<1x8xf32, #tpu.memory_space<vmem>>, vector<1x8xf32>,
    return
  }
  func.func @transform_0(%arg0: i32) -> (i32, i32) {
    %c0_i32 = arith.constant 0 : i32
    %c0_i32_0 = arith.constant 0 : i32
    return %arg0, %c0_i32 : i32, i32
  }
  func.func @transform_1(%arg0: i32) -> (i32, i32) {
    %c0_i32 = arith.constant 0 : i32
    %c0_i32_0 = arith.constant 0 : i32
    %c0_i32_1 = arith.constant 0 : i32
    return %c0_i32, %c0_i32_0 : i32, i32
  }
  func.func @transform_2(%arg0: i32) -> (i32, i32) {
    %c0_i32 = arith.constant 0 : i32
    %c0_i32_0 = arith.constant 0 : i32
    %c0_i32_1 = arith.constant 0 : i32
    return %c0_i32, %c0_i32_0 : i32, i32
  }
  func.func @transform_3(%arg0: i32) -> (i32, i32) {
    %c0_i32 = arith.constant 0 : i32
    %c0_i32_0 = arith.constant 0 : i32
    %c0_i32_1 = arith.constant 0 : i32
    return %c0_i32, %c0_i32_0 : i32, i32
  }
  func.func @transform_4(%arg0: i32) -> (i32, i32) {
    %c0_i32 = arith.constant 0 : i32
    %c0_i32_0 = arith.constant 0 : i32
    %c0_i32_1 = arith.constant 0 : i32
    return %c0_i32, %c0_i32_0 : i32, i32
  }
  func.func @transform_5(%arg0: i32) -> (i32, i32) {
    %c0_i32 = arith.constant 0 : i32
    %c0_i32_0 = arith.constant 0 : i32
    return %c0_i32, %arg0 : i32, i32
  }
}

</mosaic_0001>

<llo_original>
// kernel: tpu_custom_call.1
$region0: #{tpu_custom_call.1}
  #allocation0 [shape = 'u32[]', space=smem, size = 0x4, offset = 0x4, fixed_abs, tag = 'smem constant byte address 0x4 - core index']
  #allocation1 [shape = 'u32[144,128]{1,0:T(1,128)}', space=vmem, size = 0x12000, scoped, tag = 'internal scratch']
  #allocation2 [shape = 'f32[1,1]{1,0:T(1,128)S(6)}', space=smem, size = 0x200, scoped, tag = 'scoped memory for tpu_custom_call.1']
  %s0 = inlined_call_operand.hbm [shape: f32[8,16], index: 0, kind: input, shape index: {}]
  %s1 = inlined_call_operand.hbm [shape: f32[16,128], index: 1, kind: input, shape index: {}]
  %s2 = inlined_call_operand.vmem [shape: f32[1,128], index: 2, kind: input, shape index: {}]
  %s3 = inlined_call_operand.vmem [shape: f32[1,128], index: 3, kind: input, shape index: {}]
  %s4 = inlined_call_operand.<no memory space> [shape: f32[1,1], index: 4, kind: input, shape index: {}]
  %s5 = inlined_call_operand.hbm [shape: f32[1,8], index: 5, kind: output, shape index: {}]
  %s6 = sld [smem:[#allocation0]]
  $region38: #{tpu_custom_call.1} parent=0
    _
  %s8 = ssub.s32 1, %s6
  %s9 = scalar_select 0, %s8, %s6
  %10 = sst [smem:[#allocation2]] %s4
  $region1: #{tpu_custom_call.1} parent=0
    #allocation3 [shape = 'u8[4096]{0}', space=vmem, size = 0x1000, scoped, tag = 'input window, operand 0, single buffered']
    #allocation4 [shape = 's32[1]{0}', space=sflag, size = 0x4, scoped, tag = 'scoped memory for tpu_custom_call.1']
    #allocation5 [shape = 's32[1]{0}', space=sflag, size = 0x4, scoped, tag = 'scoped memory for tpu_custom_call.1']
    #allocation6 [shape = 'u8[8192]{0}', space=vmem, size = 0x2000, scoped, tag = 'input window, operand 1, single buffered']
    #allocation7 [shape = 's32[1]{0}', space=sflag, size = 0x4, scoped, tag = 'scoped memory for tpu_custom_call.1']
    #allocation8 [shape = 'u8[512]{0}', space=vmem, size = 0x400, scoped, tag = 'output window, operand 0, single buffered']
    %11 = vsyncpa [#allocation4], 0
    %12 = vsyncpa [#allocation7], 0
    %13 = vsyncpa [#allocation5], 0
    // Predicated region
    $region2: #{tpu_custom_call.1} parent=1 // pred_check
      _
    $region3: #{tpu_custom_call.1} parent=1 // pred_check_branch
      %15 = sbr.rel (0) target = $region5
    $region4: #{tpu_custom_call.1} parent=1 // pred_region
      %s17 = ssub.s32 128, 128
      %18 = vsyncadd [#allocation4], %s17
      %s20 = sshll.u32 [#allocation3], 4
      %s21 = int_to_ptr.vmem [resolvable:$true] %s20
      %23 = dma.hbm_to_vmem [thread:$0]  %s0, 128, %s21, [#allocation4]
    $region5: #{tpu_custom_call.1} parent=1 // pred_fallthru
      _
    // Predicated region
    $region6: #{tpu_custom_call.1} parent=1 // pred_check
      _
    $region7: #{tpu_custom_call.1} parent=1 // pred_check_branch
      %25 = sbr.rel (0) target = $region9
    $region8: #{tpu_custom_call.1} parent=1 // pred_region
      %s27 = ssub.s32 256, 256
      %28 = vsyncadd [#allocation7], %s27
      %s29 = sshll.u32 [#allocation6], 4
      %s30 = int_to_ptr.vmem [resolvable:$true] %s29
      %35 = dma.hbm_to_vmem [thread:$0]  %s1, 256, %s30, [#allocation7], 128, 128, 8
    $region9: #{tpu_custom_call.1} parent=1 // pred_fallthru
      _
    // Predicated region
    $region10: #{tpu_custom_call.1} parent=1 // pred_check
      _
    $region11: #{tpu_custom_call.1} parent=1 // pred_check_branch
      %37 = sbr.rel (0) target = $region13
    $region12: #{tpu_custom_call.1} parent=1 // pred_region
      _
    $region13: #{tpu_custom_call.1} parent=1 // pred_fallthru
      _
    // Predicated region
    $region14: #{tpu_custom_call.1} parent=1 // pred_check
      _
    $region15: #{tpu_custom_call.1} parent=1 // pred_check_branch
      %39 = sbr.rel (0) target = $region17
    $region16: #{tpu_custom_call.1} parent=1 // pred_region
      _
    $region17: #{tpu_custom_call.1} parent=1 // pred_fallthru
      _
    // Predicated region
    $region18: #{tpu_custom_call.1} parent=1 // pred_check
      _
    $region19: #{tpu_custom_call.1} parent=1 // pred_check_branch
      %41 = sbr.rel (0) target = $region21
    $region20: #{tpu_custom_call.1} parent=1 // pred_region
      _
    $region21: #{tpu_custom_call.1} parent=1 // pred_fallthru
      _
    // Predicated region
    $region22: #{tpu_custom_call.1} parent=1 // pred_check
      _
    $region23: #{tpu_custom_call.1} parent=1 // pred_check_branch
      %43 = sbr.rel (0) target = $region25
    $region24: #{tpu_custom_call.1} parent=1 // pred_region
      %44 = dma.done [#allocation4], 128
    $region25: #{tpu_custom_call.1} parent=1 // pred_fallthru
      _
    // Predicated region
    $region26: #{tpu_custom_call.1} parent=1 // pred_check
      _
    $region27: #{tpu_custom_call.1} parent=1 // pred_check_branch
      %46 = sbr.rel (0) target = $region29
    $region28: #{tpu_custom_call.1} parent=1 // pred_region
      %47 = dma.done [#allocation7], 256
    $region29: #{tpu_custom_call.1} parent=1 // pred_fallthru
      _
    %v48 = vld [vmem:[#allocation3] sm:$0xff]
    %v49 = vld [vmem:[#allocation6] sm:$0xff]
    %v50 = vld [vmem:[#allocation6 + $0x8] sm:$0xff]
    %v51 = vld [vmem:[%s2] sm:$0x1]
    %v53 = vlaneseq
    %v54 = vshrl.u32 %v53, 7
    %v55 = vsub.s32 0, %v54
    %v56 = vrot.slane %v51, %v55
    %vm58 = vcmask 130048
    %v60 = vsel %vm58, %v48, 0
    %62 = vmatprep.subr.mxu0 0.0
    %63 = vmatpush1.msra.mxu0 0.0
    %64 = vmatprep.subr.mxu0 0.0
    %65 = vmatpush1.msra.mxu0 0.0
    %66 = vmatprep.subr.mxu0 0.0
    %67 = vmatpush1.msra.mxu0 0.0
    %68 = vmatprep.subr.mxu0 0.0
    %69 = vmatpush1.msra.mxu0 0.0
    %70 = vmatprep.subr.mxu0 0.0
    %71 = vmatpush1.msra.mxu0 0.0
    %72 = vmatprep.subr.mxu0 0.0
    %73 = vmatpush1.msra.mxu0 0.0
    %74 = vmatprep.subr.mxu0 0.0
    %75 = vmatpush1.msra.mxu0 0.0
    %76 = vmatprep.subr.mxu0 0.0
    %77 = vmatpush1.msra.mxu0 0.0
    %78 = vmatprep.subr.mxu0 0.0
    %79 = vmatpush1.msra.mxu0 0.0
    %80 = vmatprep.subr.mxu0 0.0
    %81 = vmatpush1.msra.mxu0 0.0
    %82 = vmatprep.subr.mxu0 0.0
    %83 = vmatpush1.msra.mxu0 0.0
    %84 = vmatprep.subr.mxu0 0.0
    %85 = vmatpush1.msra.mxu0 0.0
    %86 = vmatprep.subr.mxu0 0.0
    %87 = vmatpush1.msra.mxu0 0.0
    %88 = vmatprep.subr.mxu0 0.0
    %89 = vmatpush1.msra.mxu0 0.0
    %90 = vmatprep.subr.mxu0 0.0
    %91 = vmatpush1.msra.mxu0 %v50
    %92 = vmatprep.subr.mxu0 0.0
    %93 = vmatpush1.msra.mxu0 %v49
    %94 = vmatprep.subr.mxu0 0.0
    %95 = vmatpush2.msra.mxu0 0.0
    %96 = vmatprep.subr.mxu0 0.0
    %97 = vmatpush2.msra.mxu0 0.0
    %98 = vmatprep.subr.mxu0 0.0
    %99 = vmatpush2.msra.mxu0 0.0
    %100 = vmatprep.subr.mxu0 0.0
    %101 = vmatpush2.msra.mxu0 0.0
    %102 = vmatprep.subr.mxu0 0.0
    %103 = vmatpush2.msra.mxu0 0.0
    %104 = vmatprep.subr.mxu0 0.0
    %105 = vmatpush2.msra.mxu0 0.0
    %106 = vmatprep.subr.mxu0 0.0
    %107 = vmatpush2.msra.mxu0 0.0
    %108 = vmatprep.subr.mxu0 0.0
    %109 = vmatpush2.msra.mxu0 0.0
    %110 = vmatprep.subr.mxu0 0.0
    %111 = vmatpush2.msra.mxu0 0.0
    %112 = vmatprep.subr.mxu0 0.0
    %113 = vmatpush2.msra.mxu0 0.0
    %114 = vmatprep.subr.mxu0 0.0
    %115 = vmatpush2.msra.mxu0 0.0
    %116 = vmatprep.subr.mxu0 0.0
    %117 = vmatpush2.msra.mxu0 0.0
    %118 = vmatprep.subr.mxu0 0.0
    %119 = vmatpush2.msra.mxu0 0.0
    %120 = vmatprep.subr.mxu0 0.0
    %121 = vmatpush2.msra.mxu0 0.0
    %122 = vmatprep.subr.mxu0 0.0
    %123 = vmatpush2.msra.mxu0 0.0
    %124 = vmatprep.subr.mxu0 0.0
    %125 = vmatpush2.msra.mxu0 0.0
    %126 = vmatprep.mubr.f32.mxu0 0.0
    %127 = vmatmul.mubr.f32.gmra.mxu0 %v60
    %v128 = vpop.f32.mrf.mxu0
    %v129 = vadd.f32 %v56, %v128
    %v130 = vpop.f32.mrf.mxu0
    %131 = vdwg.mxu0
    %v132 = vmax.f32 %v129, 0.0
    %v133 = vld [vmem:[%s3] sm:$0x1]
    %s134 = sld [smem:[#allocation2]]
    %v135 = vstv %s134
    %136 = vmatprep.subr.mxu0 0.0
    %137 = vmatpush1.xpose.msra.mxu0 0.0
    %138 = vmatprep.subr.mxu0 0.0
    %139 = vmatpush1.xpose.msra.mxu0 0.0
    %140 = vmatprep.subr.mxu0 0.0
    %141 = vmatpush1.xpose.msra.mxu0 0.0
    %142 = vmatprep.subr.mxu0 0.0
    %143 = vmatpush1.xpose.msra.mxu0 0.0
    %144 = vmatprep.subr.mxu0 0.0
    %145 = vmatpush1.xpose.msra.mxu0 0.0
    %146 = vmatprep.subr.mxu0 0.0
    %147 = vmatpush1.xpose.msra.mxu0 0.0
    %148 = vmatprep.subr.mxu0 0.0
    %149 = vmatpush1.xpose.msra.mxu0 0.0
    %150 = vmatprep.subr.mxu0 0.0
    %151 = vmatpush1.xpose.msra.mxu0 0.0
    %152 = vmatprep.subr.mxu0 0.0
    %153 = vmatpush1.xpose.msra.mxu0 0.0
    %154 = vmatprep.subr.mxu0 0.0
    %155 = vmatpush1.xpose.msra.mxu0 0.0
    %156 = vmatprep.subr.mxu0 0.0
    %157 = vmatpush1.xpose.msra.mxu0 0.0
    %158 = vmatprep.subr.mxu0 0.0
    %159 = vmatpush1.xpose.msra.mxu0 0.0
    %160 = vmatprep.subr.mxu0 0.0
    %161 = vmatpush1.xpose.msra.mxu0 0.0
    %162 = vmatprep.subr.mxu0 0.0
    %163 = vmatpush1.xpose.msra.mxu0 0.0
    %164 = vmatprep.subr.mxu0 0.0
    %165 = vmatpush1.xpose.msra.mxu0 0.0
    %166 = vmatprep.subr.mxu0 0.0
    %167 = vmatpush1.xpose.msra.mxu0 %v132
    %168 = vmatprep.subr.mxu0 0.0
    %169 = vmatpush2.xpose.msra.mxu0 0.0
    %170 = vmatprep.subr.mxu0 0.0
    %171 = vmatpush2.xpose.msra.mxu0 0.0
    %172 = vmatprep.subr.mxu0 0.0
    %173 = vmatpush2.xpose.msra.mxu0 0.0
    %174 = vmatprep.subr.mxu0 0.0
    %175 = vmatpush2.xpose.msra.mxu0 0.0
    %176 = vmatprep.subr.mxu0 0.0
    %177 = vmatpush2.xpose.msra.mxu0 0.0
    %178 = vmatprep.subr.mxu0 0.0
    %179 = vmatpush2.xpose.msra.mxu0 0.0
    %180 = vmatprep.subr.mxu0 0.0
    %181 = vmatpush2.xpose.msra.mxu0 0.0
    %182 = vmatprep.subr.mxu0 0.0
    %183 = vmatpush2.xpose.msra.mxu0 0.0
    %184 = vmatprep.subr.mxu0 0.0
    %185 = vmatpush2.xpose.msra.mxu0 0.0
    %186 = vmatprep.subr.mxu0 0.0
    %187 = vmatpush2.xpose.msra.mxu0 0.0
    %188 = vmatprep.subr.mxu0 0.0
    %189 = vmatpush2.xpose.msra.mxu0 0.0
    %190 = vmatprep.subr.mxu0 0.0
    %191 = vmatpush2.xpose.msra.mxu0 0.0
    %192 = vmatprep.subr.mxu0 0.0
    %193 = vmatpush2.xpose.msra.mxu0 0.0
    %194 = vmatprep.subr.mxu0 0.0
    %195 = vmatpush2.xpose.msra.mxu0 0.0
    %196 = vmatprep.subr.mxu0 0.0
    %197 = vmatpush2.xpose.msra.mxu0 0.0
    %198 = vmatprep.subr.mxu0 0.0
    %199 = vmatpush2.xpose.msra.mxu0 0.0
    %200 = vmatprep.mubr.f32.mxu0 0.0
    %201 = vmatmul.mubr.f32.gmra.mxu0 %v133
    %v202 = vpop.f32.mrf.mxu0
    %v203 = vadd.f32 %v135, %v202
    %v204 = vpop.f32.mrf.mxu0
    %205 = vdwg.mxu0
    %vm206 = vcmask 57344
    %207 = vst.msk [vmem:[#allocation8] sm:$0x1] %vm206, %v203
    // Predicated region
    $region30: #{tpu_custom_call.1} parent=1 // pred_check
      _
    $region31: #{tpu_custom_call.1} parent=1 // pred_check_branch
      %209 = sbr.rel (0) target = $region33
    $region32: #{tpu_custom_call.1} parent=1 // pred_region
      %s211 = ssub.s32 16, 16
      %212 = vsyncadd [#allocation5], %s211
      %s214 = sshll.u32 [#allocation8], 4
      %s215 = int_to_ptr.vmem [resolvable:$true] %s214
      %217 = dma.vmem_to_hbm [thread:$0]  %s215, 16, %s5, [#allocation5]
    $region33: #{tpu_custom_call.1} parent=1 // pred_fallthru
      _
    // Predicated region
    $region34: #{tpu_custom_call.1} parent=1 // pred_check
      _
    $region35: #{tpu_custom_call.1} parent=1 // pred_check_branch
      %219 = sbr.rel (0) target = $region37
    $region36: #{tpu_custom_call.1} parent=1 // pred_region
      %220 = dma.done [#allocation5], 16
    $region37: #{tpu_custom_call.1} parent=1 // pred_fallthru
      _
    %221 = vsyncpa [#allocation4], 1
    %222 = vsyncpa [#allocation7], 1
    %223 = vsyncpa [#allocation5], 1

</llo_original>
